<compile_context>
chip_gen: v5e
topology: v5e:2x2
jax: 0.10.0
libtpu: 0.0.40
codegen_flags: <defaults>
</compile_context>

<pallas_src>
import jax
import jax.numpy as jnp
from jax.experimental import pallas as pl
from jax.experimental.pallas import tpu as pltpu


def attention_pooling_kernel(x_ref, w_ref, b_ref, gamma_ref, beta_ref, o_ref):
    """Fused: linear score (MXU) -> stable softmax over S -> weighted sum (MXU)
    -> LayerNorm.

    x_ref:     (TB, S, D) VMEM, input dtype (never upcast as a full tile)
    w_ref:     (D, 1)     VMEM  (nn.Linear(D, 1).weight, column vector)
    b_ref:     (1, 1)     VMEM  (nn.Linear(D, 1).bias)
    gamma_ref: (1, D)     VMEM  (LayerNorm weight)
    beta_ref:  (1, D)     VMEM  (LayerNorm bias)
    o_ref:     (TB, D)    VMEM
    """
    tb, s_len, d = x_ref.shape

    x = x_ref[...]                                        # (TB, S, D), HBM dtype
    w_col = w_ref[...].astype(x.dtype)                    # (D, 1)
    bias = b_ref[...].astype(jnp.float32)                 # (1, 1)

    # Attention scores on the MXU: merge leading dims (lane dim untouched) and
    # contract over D with f32 accumulation.
    scores = jnp.dot(x.reshape(tb * s_len, d), w_col,
                     preferred_element_type=jnp.float32)   # (TB*S, 1)
    scores = scores.reshape(tb, s_len) + bias              # (TB, S), f32

    # Numerically stable softmax over S; normalization deferred.
    m = jnp.max(scores, axis=-1, keepdims=True)            # (TB, 1)
    e = jnp.exp(scores - m)                                 # (TB, S), f32
    l = jnp.sum(e, axis=-1, keepdims=True)                  # (TB, 1)

    # Unnormalized weighted sum over S as a batched MXU contraction
    # (flash-attention 'bqk,bkd->bqd' with q = 1): softmax weights are cast to
    # the x dtype, x stays in its HBM dtype, accumulation is f32.
    acc = jnp.einsum(
        "bks,bsd->bkd",
        e.astype(x.dtype).reshape(tb, 1, s_len), x,
        preferred_element_type=jnp.float32,
    )                                                       # (TB, 1, D)
    ws = acc.reshape(tb, d) / l                             # (TB, D), f32

    # LayerNorm over the feature dim (eps=1e-5, biased variance, affine).
    mean = jnp.mean(ws, axis=-1, keepdims=True)             # (TB, 1)
    centered = ws - mean
    var = jnp.mean(centered * centered, axis=-1, keepdims=True)
    normed = centered * jax.lax.rsqrt(var + 1e-5)           # (TB, D)

    gamma = gamma_ref[...].astype(jnp.float32)              # (1, D)
    beta = beta_ref[...].astype(jnp.float32)                # (1, D)
    o_ref[...] = (normed * gamma + beta).astype(o_ref.dtype)


def _vmem_capacity_bytes():
    try:
        return int(pltpu.get_tpu_info().vmem_capacity_bytes)
    except Exception:
        return 64 * 1024 * 1024   # conservative: v7x per-TensorCore VMEM


def attention_pooling(x, att_w, att_b, ln_gamma, ln_beta):
    """x: (B, S, D) or (B, D); params follow nn.Linear(D, 1) / nn.LayerNorm(D)."""
    if x.ndim == 2:
        x = x[:, None, :]                       # unsqueeze(1), matches the module
    B, S, D = x.shape
    out_dtype = x.dtype

    # Parameters: attention weight as a (D, 1) column so the score matmul needs
    # no in-kernel transpose; everything else as lane-dense row vectors.
    w = att_w.reshape(D, 1)
    b = att_b.reshape(1, 1)
    g = ln_gamma.reshape(1, D)
    bt = ln_beta.reshape(1, D)

    itemsize = jnp.dtype(x.dtype).itemsize
    row_bytes = S * D * itemsize                # one batch row, in the HBM dtype

    # Per-generation block budget: ~1/16 of VMEM (input double-buffering plus
    # the small f32 intermediates plus headroom), clamped to [2 MiB, 8 MiB]
    # (measured mem-bound kernels are already ~85% of roofline around there).
    vmem_cap = _vmem_capacity_bytes()
    block_budget = min(8 * 1024 * 1024, max(2 * 1024 * 1024, vmem_cap // 16))
    tb_budget = (block_budget // max(1, row_bytes)) // 8 * 8
    if tb_budget < 8:
        # TODO(synk): long-sequence path (second "arbitrary" grid axis over S
        # with online softmax) not implemented; fail loudly instead of silently
        # exceeding the VMEM budget.
        raise ValueError(
            f"AttentionPooling Pallas kernel: a single 8-row x slab "
            f"({8 * row_bytes} bytes, S={S}, D={D}) exceeds the per-block VMEM "
            f"budget ({block_budget} bytes).")
    tb_budget = min(512, tb_budget)

    if B <= 8:
        tb = B                                   # tiny batch: one exact block
    else:
        # Keep >= ~4 grid steps so v7x megacore sharding and the double-buffer
        # pipeline stay engaged even when B would fit a single block.
        tb_multi = ((pl.cdiv(B, 4) + 7) // 8) * 8
        tb = max(8, min(tb_budget, tb_multi))
    grid = (pl.cdiv(B, tb),)

    vmem_limit = int(min(vmem_cap // 2, 64 * 1024 * 1024))

    cost = pl.CostEstimate(
        flops=4 * B * S * D + 8 * B * S + 10 * B * D,
        transcendentals=B * S + B,
        bytes_accessed=(B * S * D * itemsize
                        + B * D * jnp.dtype(out_dtype).itemsize
                        + 3 * D * 4 + 4),
    )

    param_map = lambda i: (0, 0)
    return pl.pallas_call(
        attention_pooling_kernel,
        out_shape=jax.ShapeDtypeStruct((B, D), out_dtype),
        grid=grid,
        in_specs=[
            pl.BlockSpec((tb, S, D), lambda i: (i, 0, 0)),   # x: batch-tiled
            pl.BlockSpec((D, 1), param_map),                 # attention weight (col)
            pl.BlockSpec((1, 1), param_map),                 # attention bias
            pl.BlockSpec((1, D), param_map),                 # LayerNorm gamma
            pl.BlockSpec((1, D), param_map),                 # LayerNorm beta
        ],
        out_specs=pl.BlockSpec((tb, D), lambda i: (i, 0)),
        compiler_params=pltpu.CompilerParams(
            dimension_semantics=("parallel",),
            vmem_limit_bytes=vmem_limit,
        ),
        cost_estimate=cost,
    )(x, w, b, g, bt)


def attention_pooling_ref(x, att_w, att_b, ln_gamma, ln_beta):
    """Pure-JAX reference mirroring the PyTorch forward."""
    if x.ndim == 2:
        x = x[:, None, :]
    scores = jnp.einsum("bsd,d->bs", x, att_w.reshape(-1)) + att_b.reshape(())
    weights = jax.nn.softmax(scores, axis=1)[:, :, None]
    ws = jnp.sum(weights * x, axis=1)
    mean = jnp.mean(ws, axis=-1, keepdims=True)
    var = jnp.mean((ws - mean) ** 2, axis=-1, keepdims=True)
    normed = (ws - mean) / jnp.sqrt(var + 1e-5)
    return normed * ln_gamma.reshape(1, -1) + ln_beta.reshape(1, -1)


if __name__ == "__main__":
    B, S, D = 2, 8, 32   # batch=2, seq=8, hidden (input_dim)=32

    key = jax.random.PRNGKey(0)
    kx, kw, kb, kx2 = jax.random.split(key, 4)

    x = jax.random.normal(kx, (B, S, D), dtype=jnp.float32)

    # Parameter shapes consistent with the module's __init__:
    # nn.Linear(D, 1): weight (1, D), bias (1,);  nn.LayerNorm(D): ones / zeros.
    bound = 1.0 / (D ** 0.5)
    att_w = jax.random.uniform(kw, (1, D), minval=-bound, maxval=bound, dtype=jnp.float32)
    att_b = jax.random.uniform(kb, (1,), minval=-bound, maxval=bound, dtype=jnp.float32)
    ln_gamma = jnp.ones((D,), dtype=jnp.float32)
    ln_beta = jnp.zeros((D,), dtype=jnp.float32)

    # 3-D input path.
    out = jax.block_until_ready(attention_pooling(x, att_w, att_b, ln_gamma, ln_beta))
    ref = attention_pooling_ref(x, att_w, att_b, ln_gamma, ln_beta)
    assert out.shape == (B, D)
    assert jnp.allclose(out, ref, atol=1e-5, rtol=1e-5), "3-D path mismatch vs JAX reference"

    # 2-D input path (module unsqueezes to (B, 1, D)).
    x2 = jax.random.normal(kx2, (B, D), dtype=jnp.float32)
    out2 = jax.block_until_ready(attention_pooling(x2, att_w, att_b, ln_gamma, ln_beta))
    ref2 = attention_pooling_ref(x2, att_w, att_b, ln_gamma, ln_beta)
    assert out2.shape == (B, D)
    assert jnp.allclose(out2, ref2, atol=1e-5, rtol=1e-5), "2-D path mismatch vs JAX reference"

    print("KERNEL_OK")
</pallas_src>

<mosaic_0001>
module attributes {stable_mosaic.version = 11 : i64} {
  func.func @attention_pooling_kernel(%arg0: i32, %arg1: memref<2x8x32xf32, #tpu.memory_space<vmem>>, %arg2: memref<32x1xf32, #tpu.memory_space<vmem>>, %arg3: memref<1x1xf32, #tpu.memory_space<vmem>>, %arg4: memref<1x32xf32, #tpu.memory_space<vmem>>, %arg5: memref<1x32xf32, #tpu.memory_space<vmem>>, %arg6: memref<2x32xf32, #tpu.memory_space<vmem>>) attributes {dimension_semantics = [#tpu.dimension_semantics<parallel>], iteration_bounds = array<i64: 1>, scalar_prefetch = 0 : i64, scratch_operands = 0 : i64, tpu.core_type = #tpu.core_type<tc>, window_params = [{transform_indices = @transform_0, window_bounds = array<i64: 2, 8, 32>}, {pipeline_mode = #tpu.pipeline_mode<synchronous>, transform_indices = @transform_1, window_bounds = array<i64: 32, 1>}, {pipeline_mode = #tpu.pipeline_mode<synchronous>, transform_indices = @transform_2, window_bounds = array<i64: 1, 1>}, {pipeline_mode = #tpu.pipeline_mode<synchronous>, transform_indices = @transform_3, window_bounds = array<i64: 1, 32>}, {pipeline_mode = #tpu.pipeline_mode<synchronous>, transform_indices = @transform_4, window_bounds = array<i64: 1, 32>}, {transform_indices = @transform_5, window_bounds = array<i64: 2, 32>}]} {
    %c0 = arith.constant 0 : index
    %c0_0 = arith.constant 0 : index
    %c0_1 = arith.constant 0 : index
    %0 = vector.load %arg1[%c0, %c0_0, %c0_1] : memref<2x8x32xf32, #tpu.memory_space<vmem>>, vector<2x8x32xf32>
    %c0_2 = arith.constant 0 : index
    %c0_3 = arith.constant 0 : index
    %1 = vector.load %arg2[%c0_2, %c0_3] : memref<32x1xf32, #tpu.memory_space<vmem>>, vector<32x1xf32>
    %c0_4 = arith.constant 0 : index
    %c0_5 = arith.constant 0 : index
    %2 = vector.load %arg3[%c0_4, %c0_5] : memref<1x1xf32, #tpu.memory_space<vmem>>, vector<1x1xf32>
    %3 = vector.shape_cast %0 : vector<2x8x32xf32> to vector<16x32xf32>
    %cst = arith.constant dense<0.000000e+00> : vector<16x1xf32>
    %4 = tpu.matmul %3, %1, %cst {dimension_numbers = #tpu.dot_dimension_numbers<[1], [0], [0], [1], [0, 0, 1, 1], [], []>} : vector<16x32xf32>, vector<32x1xf32>, vector<16x1xf32> -> vector<16x1xf32>
    %5 = vector.shape_cast %4 : vector<16x1xf32> to vector<2x8xf32>
    %6 = vector.broadcast %2 : vector<1x1xf32> to vector<2x8xf32>
    %7 = arith.addf %5, %6 : vector<2x8xf32>
    %cst_6 = arith.constant dense<0xFF800000> : vector<2xf32>
    %8 = vector.multi_reduction <maximumf>, %7, %cst_6 [1] : vector<2x8xf32> to vector<2xf32>
    %9 = vector.shape_cast %8 : vector<2xf32> to vector<2x1xf32>
    %10 = vector.broadcast %9 : vector<2x1xf32> to vector<2x8xf32>
    %11 = arith.subf %7, %10 : vector<2x8xf32>
    %12 = math.exp %11 : vector<2x8xf32>
    %cst_7 = arith.constant dense<0.000000e+00> : vector<2xf32>
    %13 = vector.multi_reduction <add>, %12, %cst_7 [1] : vector<2x8xf32> to vector<2xf32>
    %14 = vector.shape_cast %13 : vector<2xf32> to vector<2x1xf32>
    %15 = vector.shape_cast %12 : vector<2x8xf32> to vector<2x1x8xf32>
    "tpu.trace_start"() <{level = 10 : i32, message = "bks,bsd->bkd"}> : () -> ()
    %cst_8 = arith.constant dense<0.000000e+00> : vector<2x1x32xf32>
    %16 = tpu.matmul %15, %0, %cst_8 {dimension_numbers = #tpu.dot_dimension_numbers<[2], [1], [1], [2], [0, 0, 0, 1, 1, 2], [0], [0]>} : vector<2x1x8xf32>, vector<2x8x32xf32>, vector<2x1x32xf32> -> vector<2x1x32xf32>
    "tpu.trace_stop"() : () -> ()
    %17 = vector.shape_cast %16 : vector<2x1x32xf32> to vector<2x32xf32>
    %18 = vector.broadcast %14 : vector<2x1xf32> to vector<2x32xf32>
    %19 = arith.divf %17, %18 : vector<2x32xf32>
    %cst_9 = arith.constant dense<0.000000e+00> : vector<2xf32>
    %20 = vector.multi_reduction <add>, %19, %cst_9 [1] : vector<2x32xf32> to vector<2xf32>
    %21 = vector.shape_cast %20 : vector<2xf32> to vector<2x1xf32>
    %cst_10 = arith.constant 3.200000e+01 : f32
    %22 = vector.broadcast %cst_10 : f32 to vector<2x1xf32>
    %23 = arith.divf %21, %22 : vector<2x1xf32>
    %24 = vector.broadcast %23 : vector<2x1xf32> to vector<2x32xf32>
    %25 = arith.subf %19, %24 : vector<2x32xf32>
    %26 = arith.mulf %25, %25 : vector<2x32xf32>
    %cst_11 = arith.constant dense<0.000000e+00> : vector<2xf32>
    %27 = vector.multi_reduction <add>, %26, %cst_11 [1] : vector<2x32xf32> to vector<2xf32>
    %28 = vector.shape_cast %27 : vector<2xf32> to vector<2x1xf32>
    %cst_12 = arith.constant 3.200000e+01 : f32
    %29 = vector.broadcast %cst_12 : f32 to vector<2x1xf32>
    %30 = arith.divf %28, %29 : vector<2x1xf32>
    %cst_13 = arith.constant 9.99999974E-6 : f32
    %31 = vector.broadcast %cst_13 : f32 to vector<2x1xf32>
    %32 = arith.addf %30, %31 : vector<2x1xf32>
    %33 = math.rsqrt %32 : vector<2x1xf32>
    %34 = vector.broadcast %33 : vector<2x1xf32> to vector<2x32xf32>
    %35 = arith.mulf %25, %34 : vector<2x32xf32>
    %c0_14 = arith.constant 0 : index
    %c0_15 = arith.constant 0 : index
    %36 = vector.load %arg4[%c0_14, %c0_15] : memref<1x32xf32, #tpu.memory_space<vmem>>, vector<1x32xf32>
    %c0_16 = arith.constant 0 : index
    %c0_17 = arith.constant 0 : index
    %37 = vector.load %arg5[%c0_16, %c0_17] : memref<1x32xf32, #tpu.memory_space<vmem>>, vector<1x32xf32>
    %38 = vector.broadcast %36 : vector<1x32xf32> to vector<2x32xf32>
    %39 = arith.mulf %35, %38 : vector<2x32xf32>
    %40 = vector.broadcast %37 : vector<1x32xf32> to vector<2x32xf32>
    %41 = arith.addf %39, %40 : vector<2x32xf32>
    %c0_18 = arith.constant 0 : index
    %c0_19 = arith.constant 0 : index
    %42 = vector.load %arg6[%c0_18, %c0_19] : memref<2x32xf32, #tpu.memory_space<vmem>>, vector<2x32xf32>
    tpu.vector_store %arg6[%c0_18, %c0_19], %41 {strides = array<i32>} : memref<2x32xf32, #tpu.memory_space<vmem>>, vector<2x32xf32>,
    return
  }
  func.func @transform_0(%arg0: i32) -> (i32, i32, i32) {
    %c0_i32 = arith.constant 0 : i32
    %c0_i32_0 = arith.constant 0 : i32
    %c0_i32_1 = arith.constant 0 : i32
    return %arg0, %c0_i32, %c0_i32_0 : i32, i32, i32
  }
  func.func @transform_1(%arg0: i32) -> (i32, i32) {
    %c0_i32 = arith.constant 0 : i32
    %c0_i32_0 = arith.constant 0 : i32
    %c0_i32_1 = arith.constant 0 : i32
    return %c0_i32, %c0_i32_0 : i32, i32
  }
  func.func @transform_2(%arg0: i32) -> (i32, i32) {
    %c0_i32 = arith.constant 0 : i32
    %c0_i32_0 = arith.constant 0 : i32
    %c0_i32_1 = arith.constant 0 : i32
    return %c0_i32, %c0_i32_0 : i32, i32
  }
  func.func @transform_3(%arg0: i32) -> (i32, i32) {
    %c0_i32 = arith.constant 0 : i32
    %c0_i32_0 = arith.constant 0 : i32
    %c0_i32_1 = arith.constant 0 : i32
    return %c0_i32, %c0_i32_0 : i32, i32
  }
  func.func @transform_4(%arg0: i32) -> (i32, i32) {
    %c0_i32 = arith.constant 0 : i32
    %c0_i32_0 = arith.constant 0 : i32
    %c0_i32_1 = arith.constant 0 : i32
    return %c0_i32, %c0_i32_0 : i32, i32
  }
  func.func @transform_5(%arg0: i32) -> (i32, i32) {
    %c0_i32 = arith.constant 0 : i32
    %c0_i32_0 = arith.constant 0 : i32
    return %arg0, %c0_i32 : i32, i32
  }
}

</mosaic_0001>

<llo_original>
// kernel: tpu_custom_call.1
$region0: #{tpu_custom_call.1}
  #allocation0 [shape = 'u32[]', space=smem, size = 0x4, offset = 0x4, fixed_abs, tag = 'smem constant byte address 0x4 - core index']
  #allocation1 [shape = 'u32[72,128]{1,0:T(1,128)}', space=vmem, size = 0x9000, scoped, tag = 'internal scratch']
  #allocation2 [shape = 'f32[1,1]{1,0:T(1,128)S(1)}', space=vmem, size = 0x200, scoped, tag = 'scoped memory for tpu_custom_call.1']
  %s0 = inlined_call_operand.vmem [shape: f32[2,8,32], index: 0, kind: input, shape index: {}]
  %s1 = inlined_call_operand.vmem [shape: f32[32,1], index: 1, kind: input, shape index: {}]
  %s2 = inlined_call_operand.<no memory space> [shape: f32[1,1], index: 2, kind: input, shape index: {}]
  %s3 = inlined_call_operand.vmem [shape: f32[1,32], index: 3, kind: input, shape index: {}]
  %s4 = inlined_call_operand.vmem [shape: f32[1,32], index: 4, kind: input, shape index: {}]
  %s5 = inlined_call_operand.hbm [shape: f32[2,32], index: 5, kind: output, shape index: {}]
  %s6 = sld [smem:[#allocation0]]
  $region30: #{tpu_custom_call.1} parent=0
    _
  %s8 = ssub.s32 1, %s6
  %s9 = scalar_select 0, %s8, %s6
  %v10 = vstv %s2
  %11 = vst [vmem:[#allocation2] sm:$0x1] %v10
  $region1: #{tpu_custom_call.1} parent=0
    #allocation3 [shape = 'u8[1024]{0}', space=vmem, size = 0x400, scoped, tag = 'output window, operand 0, single buffered']
    #allocation4 [shape = 's32[1]{0}', space=sflag, size = 0x4, scoped, tag = 'scoped memory for tpu_custom_call.1']
    %12 = vsyncpa [#allocation4], 0
    // Predicated region
    $region2: #{tpu_custom_call.1} parent=1 // pred_check
      _
    $region3: #{tpu_custom_call.1} parent=1 // pred_check_branch
      %14 = sbr.rel (0) target = $region5
    $region4: #{tpu_custom_call.1} parent=1 // pred_region
      _
    $region5: #{tpu_custom_call.1} parent=1 // pred_fallthru
      _
    // Predicated region
    $region6: #{tpu_custom_call.1} parent=1 // pred_check
      _
    $region7: #{tpu_custom_call.1} parent=1 // pred_check_branch
      %16 = sbr.rel (0) target = $region9
    $region8: #{tpu_custom_call.1} parent=1 // pred_region
      _
    $region9: #{tpu_custom_call.1} parent=1 // pred_fallthru
      _
    // Predicated region
    $region10: #{tpu_custom_call.1} parent=1 // pred_check
      _
    $region11: #{tpu_custom_call.1} parent=1 // pred_check_branch
      %18 = sbr.rel (0) target = $region13
    $region12: #{tpu_custom_call.1} parent=1 // pred_region
      _
    $region13: #{tpu_custom_call.1} parent=1 // pred_fallthru
      _
    // Predicated region
    $region14: #{tpu_custom_call.1} parent=1 // pred_check
      _
    $region15: #{tpu_custom_call.1} parent=1 // pred_check_branch
      %20 = sbr.rel (0) target = $region17
    $region16: #{tpu_custom_call.1} parent=1 // pred_region
      _
    $region17: #{tpu_custom_call.1} parent=1 // pred_fallthru
      _
    // Predicated region
    $region18: #{tpu_custom_call.1} parent=1 // pred_check
      _
    $region19: #{tpu_custom_call.1} parent=1 // pred_check_branch
      %22 = sbr.rel (0) target = $region21
    $region20: #{tpu_custom_call.1} parent=1 // pred_region
      _
    $region21: #{tpu_custom_call.1} parent=1 // pred_fallthru
      _
    %v23 = vld [vmem:[%s0] sm:$0xff]
    %v24 = vld [vmem:[%s0 + $0x8] sm:$0xff]
    %v25 = vld [vmem:[%s1] sm:$0xff]
    %v26 = vld [vmem:[%s1 + $0x8] sm:$0xff]
    %v27 = vld [vmem:[%s1 + $0x10] sm:$0xff]
    %v28 = vld [vmem:[%s1 + $0x18] sm:$0xff]
    %v29 = vld [vmem:[#allocation2] sm:$0x1]
    %vm30 = vcmask 261120
    %v32 = vsel %vm30, %v23, 0
    %v35 = vsel %vm30, %v24, 0
    %37 = vmatpush.msra.mxu0 0.0
    %38 = vmatpush.msra.mxu0 0.0
    %39 = vmatpush.msra.mxu0 0.0
    %40 = vmatpush.msra.mxu0 0.0
    %41 = vmatpush.msra.mxu0 0.0
    %42 = vmatpush.msra.mxu0 0.0
    %43 = vmatpush.msra.mxu0 0.0
    %44 = vmatpush.msra.mxu0 0.0
    %45 = vmatpush.msra.mxu0 0.0
    %46 = vmatpush.msra.mxu0 0.0
    %47 = vmatpush.msra.mxu0 0.0
    %48 = vmatpush.msra.mxu0 0.0
    %49 = vmatpush.msra.mxu0 %v28
    %50 = vmatpush.msra.mxu0 %v27
    %51 = vmatpush.msra.mxu0 %v26
    %52 = vmatpush.msra.mxu0 %v25
    %53 = vmatmul.f32.gmra.mxu0 %v32
    %v54 = vpop.f32.mrf.mxu0
    %v55 = vadd.f32 0.0, %v54
    %56 = vmatmul.f32.gmra.mxu0 %v35
    %v57 = vpop.f32.mrf.mxu0
    %v58 = vadd.f32 0.0, %v57
    %59 = vdwg.mxu0
    %v61 = vperm.slane %v29, 0
    %62 = vset.pattern.permute.xlu0 0
    %63 = vperm.xlu0 %62, %v61
    %v64 = vpop.permute.xlu0 %63
    %v66 = vadd.f32 %v55, %v64
    %v67 = vadd.f32 %v58, %v64
    %70 = vset.pattern.permute.xlu0 0
    %71 = vperm.xlu0 %70, %v66
    %v72 = vpop.permute.xlu0 %71
    %73 = vset.pattern.permute.xlu0 0
    %74 = vperm.xlu0 %73, %v67
    %v75 = vpop.permute.xlu0 %74
    %v76 = vlaneseq
    %v77 = vand.u32 %v76, 127
    %v78 = vperm.slane %v72, %v77
    %v79 = vperm.slane %v75, %v77
    %vm80 = vcmask 1041409
    %v81 = vsel %vm80, %v79, %v78
    %vm83 = vcmask 58368
    %v84 = vsel %vm83, %v81, -inf
    %85 = vmax.xlane.f32.xlu0 %v84
    %v86 = vpop.xlane.xlu0 %85
    %v88 = vperm.slane %v86, 0
    %v89 = vperm.slane %v86, 1
    %v92 = vsub.f32 %v66, %v88
    %v93 = vsub.f32 %v67, %v89
    %v94 = vmul.f32 %v92, 1.442695
    %v95 = vpow.pop %v94
    %v96 = vmul.f32 %v93, 1.442695
    %v97 = vpow.pop %v96
    %100 = vset.pattern.permute.xlu0 0
    %101 = vperm.xlu0 %100, %v95
    %v102 = vpop.permute.xlu0 %101
    %103 = vset.pattern.permute.xlu0 0
    %104 = vperm.xlu0 %103, %v97
    %v105 = vpop.permute.xlu0 %104
    %v106 = vperm.slane %v102, %v77
    %v107 = vperm.slane %v105, %v77
    %v108 = vsel %vm80, %v107, %v106
    %v110 = vsel %vm83, %v108, 0.0
    %111 = vadd.xlane.f32.xlu0 %v110
    %v112 = vpop.xlane.xlu0 %111
    %vm113 = vcmask 64512
    %v114 = vsel %vm113, %v106, 0
    %116 = vmatpush.msra.mxu0 0.0
    %117 = vmatpush.msra.mxu0 0.0
    %118 = vmatpush.msra.mxu0 0.0
    %119 = vmatpush.msra.mxu0 0.0
    %120 = vmatpush.msra.mxu0 0.0
    %121 = vmatpush.msra.mxu0 0.0
    %122 = vmatpush.msra.mxu0 0.0
    %123 = vmatpush.msra.mxu0 0.0
    %124 = vmatpush.msra.mxu0 0.0
    %125 = vmatpush.msra.mxu0 0.0
    %126 = vmatpush.msra.mxu0 0.0
    %127 = vmatpush.msra.mxu0 0.0
    %128 = vmatpush.msra.mxu0 0.0
    %129 = vmatpush.msra.mxu0 0.0
    %130 = vmatpush.msra.mxu0 0.0
    %131 = vmatpush.msra.mxu0 %v23
    %132 = vmatmul.f32.gmra.mxu0 %v114
    %v133 = vpop.f32.mrf.mxu0
    %v134 = vadd.f32 0.0, %v133
    %135 = vdwg.mxu0
    %v136 = vsel %vm113, %v107, 0
    %138 = vmatpush.msra.mxu0 0.0
    %139 = vmatpush.msra.mxu0 0.0
    %140 = vmatpush.msra.mxu0 0.0
    %141 = vmatpush.msra.mxu0 0.0
    %142 = vmatpush.msra.mxu0 0.0
    %143 = vmatpush.msra.mxu0 0.0
    %144 = vmatpush.msra.mxu0 0.0
    %145 = vmatpush.msra.mxu0 0.0
    %146 = vmatpush.msra.mxu0 0.0
    %147 = vmatpush.msra.mxu0 0.0
    %148 = vmatpush.msra.mxu0 0.0
    %149 = vmatpush.msra.mxu0 0.0
    %150 = vmatpush.msra.mxu0 0.0
    %151 = vmatpush.msra.mxu0 0.0
    %152 = vmatpush.msra.mxu0 0.0
    %153 = vmatpush.msra.mxu0 %v24
    %154 = vmatmul.f32.gmra.mxu0 %v136
    %v155 = vpop.f32.mrf.mxu0
    %v156 = vadd.f32 0.0, %v155
    %157 = vdwg.mxu0
    %v159 = vrot.slane %v112, 1
    %v162 = vrcp.pop %v112
    %v163 = vmul.f32 %v112, %v162
    %v164 = vsub.f32 1.0, %v163
    %v165 = vmul.f32 %v162, %v164
    %v166 = vadd.f32 %v162, %v165
    %vm167 = vweird.f32 %v112
    %vm168 = vweird.f32 %v162
    %vm169 = vmor %vm167, %vm168
    %v170 = vsel %vm169, %v162, %v166
    %v171 = vand.u32 2147483647, %v112
    %vm172 = vcmp.eq.f32.partialorder %v171, 8.507059e+37
    %v173 = vand.u32 %v112, 2147483648
    %v174 = vor.u32 1.1754944e-38, %v173
    %v175 = vsel %vm172, %v174, %v170
    %v176 = vmul.f32 %v134, %v175
    %v177 = vrcp.pop %v159
    %v178 = vmul.f32 %v159, %v177
    %v179 = vsub.f32 1.0, %v178
    %v180 = vmul.f32 %v177, %v179
    %v181 = vadd.f32 %v177, %v180
    %vm182 = vweird.f32 %v159
    %vm183 = vweird.f32 %v177
    %vm184 = vmor %vm182, %vm183
    %v185 = vsel %vm184, %v177, %v181
    %v186 = vand.u32 2147483647, %v159
    %vm187 = vcmp.eq.f32.partialorder %v186, 8.507059e+37
    %v188 = vand.u32 %v159, 2147483648
    %v189 = vor.u32 1.1754944e-38, %v188
    %v190 = vsel %vm187, %v189, %v185
    %v191 = vmul.f32 %v156, %v190
    %v194 = vrot.slane %v191, 7
    %v195 = vsel %vm80, %v194, %v176
    %vm197 = vcmask 254976
    %v198 = vsel %vm197, %v195, 0.0
    %199 = vadd.xlane.f32.xlu0 %v198
    %v200 = vpop.xlane.xlu0 %199
    %v201 = vrcp.pop 32.0
    %v202 = vmul.f32 32.0, %v201
    %v203 = vsub.f32 1.0, %v202
    %v204 = vmul.f32 %v201, %v203
    %v205 = vadd.f32 %v201, %v204
    %vm206 = vweird.f32 %v201
    %v207 = vsel %vm206, %v201, %v205
    %v208 = vmul.f32 %v200, %v207
    %v210 = vrot.slane %v208, 1
    %v213 = vsub.f32 %v176, %v208
    %v214 = vsub.f32 %v191, %v210
    %v215 = vmul.f32 %v213, %v213
    %v216 = vmul.f32 %v214, %v214
    %v219 = vrot.slane %v216, 7
    %v220 = vsel %vm80, %v219, %v215
    %v222 = vsel %vm197, %v220, 0.0
    %223 = vadd.xlane.f32.xlu0 %v222
    %v224 = vpop.xlane.xlu0 %223
    %v225 = vmul.f32 %v224, %v207
    %v226 = vadd.f32 %v225, 1e-05
    %v227 = vrsqrt.pop %v226
    %v228 = vmul.f32 %v227, %v226
    %v229 = vmul.f32 %v228, %v227
    %v230 = vmul.f32 0.5, %v229
    %v231 = vsub.f32 1.5, %v230
    %v232 = vmul.f32 %v227, %v231
    %vm233 = vweird.f32 %v226
    %vm234 = vweird.f32 %v227
    %vm235 = vmor %vm233, %vm234
    %v236 = vsel %vm235, %v227, %v232
    %v238 = vrot.slane %v236, 1
    %v241 = vmul.f32 %v213, %v236
    %v242 = vmul.f32 %v214, %v238
    %v243 = vld [vmem:[%s3] sm:$0x1]
    %v244 = vld [vmem:[%s4] sm:$0x1]
    %v246 = vperm.slane %v243, 0
    %v248 = vmul.f32 %v241, %v246
    %v249 = vmul.f32 %v242, %v246
    %v251 = vperm.slane %v244, 0
    %v253 = vadd.f32 %v248, %v251
    %v254 = vadd.f32 %v249, %v251
    %v257 = vrot.slane %v254, 7
    %v258 = vsel %vm80, %v257, %v253
    %260 = vst.msk [vmem:[#allocation3] sm:$0x3] %vm197, %v258
    // Predicated region
    $region22: #{tpu_custom_call.1} parent=1 // pred_check
      _
    $region23: #{tpu_custom_call.1} parent=1 // pred_check_branch
      %262 = sbr.rel (0) target = $region25
    $region24: #{tpu_custom_call.1} parent=1 // pred_region
      %264 = vsyncadd [#allocation4], 0
      %s266 = sshll.u32 [#allocation3], 4
      %s267 = int_to_ptr.vmem [resolvable:$true] %s266
      %s268 = sshll.u32 %s5, 4
      %s269 = int_to_ptr.hbm [resolvable:$true] %s268
      %271 = dma.vmem_to_hbm [thread:$0]  %s267, 32, %s269, [#allocation4]
    $region25: #{tpu_custom_call.1} parent=1 // pred_fallthru
      _
    // Predicated region
    $region26: #{tpu_custom_call.1} parent=1 // pred_check
      _
    $region27: #{tpu_custom_call.1} parent=1 // pred_check_branch
      %273 = sbr.rel (0) target = $region29
    $region28: #{tpu_custom_call.1} parent=1 // pred_region
      %275 = dma.done [#allocation4], 32
    $region29: #{tpu_custom_call.1} parent=1 // pred_fallthru
      _
    %276 = vsyncpa [#allocation4], 1

</llo_original>
